<compile_context>
chip_gen: v7x
topology: tpu7x:2x2x1
jax: 0.10.0
libtpu: 0.0.40
codegen_flags: <defaults>
</compile_context>

<pallas_src>
import functools

import jax
import jax.numpy as jnp
from jax.experimental import pallas as pl
from jax.experimental.pallas import tpu as pltpu

_MIN_SLAB_BYTES = 2 << 20   # minimum per-step I/O slab (amortize ~0.35us step cost)
_MIN_GRID_STEPS = 4         # keep enough steps for megacore sharding / pipelining


def _round_down(x, m):
    return (x // m) * m


def _round_up(x, m):
    return ((x + m - 1) // m) * m


def _vmem_budgets():
    """(tile-budget bytes, scoped vmem limit bytes) chosen per TPU generation."""
    try:
        info = pltpu.get_tpu_info()
        vmem = getattr(info, "vmem_capacity_bytes", 128 << 20)
    except Exception:
        vmem = 128 << 20
    if vmem <= (64 << 20):            # v7x: 64 MiB VMEM per TensorCore
        return 16 << 20, 40 << 20
    return 28 << 20, 64 << 20         # v5e / v6e: 128 MiB physical VMEM


def _sublane_pack(itemsize):
    # dtype-native sublane packing: f32 -> 8, bf16 -> 16, int8/fp8 -> 32.
    return max(8, 32 // max(itemsize, 1))


def _pick_row_tile(rows, d, itemsize, budget_bytes):
    """Row tile (multiple of the dtype sublane pack) sized by a VMEM byte budget."""
    pack = _sublane_pack(itemsize)
    # Double-buffered x+out tiles plus ~2 live f32 (row_tile, d) intermediates.
    per_row_bytes = 2 * d * (itemsize + itemsize) + 8 * d
    rt = max(budget_bytes // per_row_bytes, pack)
    rt = _round_down(rt, pack)
    # Prefer >= _MIN_GRID_STEPS grid steps, but never shrink a step's I/O slab
    # below ~_MIN_SLAB_BYTES (step overhead would dominate for small D).
    rows_per_step_target = _round_down(pl.cdiv(rows, _MIN_GRID_STEPS), pack)
    row_io_bytes = 2 * d * itemsize                    # one step's x + out bytes per row
    slab_min_rows = _round_up(max(_MIN_SLAB_BYTES // max(row_io_bytes, 1), 1), pack)
    rt = min(rt, max(rows_per_step_target, slab_min_rows, pack))
    # Never (much) larger than the input itself.
    rt = min(rt, _round_up(rows, pack))
    return max(_round_down(rt, pack), pack)


def _layernorm_kernel(x_ref, g_ref, b_ref, o_ref, *, eps, inv_d):
    # Pass 1: mean (f32 accumulation over the lane axis).
    mean = jnp.sum(x_ref[...].astype(jnp.float32), axis=-1, keepdims=True) * inv_d
    # Pass 2: reload x from VMEM so only the centered copy stays live; two-pass
    # variance matches the PyTorch forward (var = mean((x - mean)^2)).
    xc = x_ref[...].astype(jnp.float32) - mean          # (ROW_TILE, D), the one live f32 tile
    var = jnp.sum(xc * xc, axis=-1, keepdims=True) * inv_d
    inv_std = jax.lax.rsqrt(var + eps)                  # EUP; effectively free
    # gamma/beta arrive already in f32 (cast hoisted to the wrapper).
    o_ref[...] = (g_ref[...] * (xc * inv_std) + b_ref[...]).astype(o_ref.dtype)


def layer_normalization(x, gamma, beta, *, eps=1e-5):
    """Equivalent of LayerNormalization(parameter_shape).forward(x).

    Normalizes over the trailing len(gamma.shape) dims of x.
    """
    param_ndim = gamma.ndim
    norm_shape = x.shape[x.ndim - param_ndim:]
    assert norm_shape == gamma.shape == beta.shape

    d = 1
    for s in norm_shape:
        d *= s
    rows = 1
    for s in x.shape[: x.ndim - param_ndim]:
        rows *= s

    x2 = x.reshape(rows, d)
    # Hoist the f32 cast of the (tiny) parameters out of the grid loop.
    g2 = gamma.reshape(1, d).astype(jnp.float32)
    b2 = beta.reshape(1, d).astype(jnp.float32)

    budget_bytes, vmem_limit_bytes = _vmem_budgets()
    itemsize = jnp.dtype(x.dtype).itemsize
    row_tile = _pick_row_tile(rows, d, itemsize, budget_bytes)

    # No wrapper-side padding copy: Pallas masks the ragged last row block; the
    # garbage rows it computes on are never stored (rows are independent).
    grid = (pl.cdiv(rows, row_tile),)

    # TODO(synk): for D < 128 the lane axis is under-used (e.g. D=32 -> 25% lane
    # occupancy); packing k=128//D rows per vreg row needs a segmented lane
    # reduction (or an MXU block-diagonal-ones matmul), not done here.
    out = pl.pallas_call(
        functools.partial(_layernorm_kernel, eps=eps, inv_d=1.0 / d),
        out_shape=jax.ShapeDtypeStruct((rows, d), x.dtype),
        grid_spec=pltpu.PrefetchScalarGridSpec(
            num_scalar_prefetch=0,
            grid=grid,
            in_specs=[
                pl.BlockSpec((row_tile, d), lambda i: (i, 0)),
                pl.BlockSpec((1, d), lambda i: (0, 0)),
                pl.BlockSpec((1, d), lambda i: (0, 0)),
            ],
            out_specs=pl.BlockSpec((row_tile, d), lambda i: (i, 0)),
        ),
        compiler_params=pltpu.CompilerParams(
            dimension_semantics=("parallel",),   # shardable across v7x's 2 TCs
            vmem_limit_bytes=vmem_limit_bytes,
        ),
    )(x2, g2, b2)

    return out.reshape(x.shape)


if __name__ == "__main__":
    # Shapes implied by a transformer encoder: (batch, seq, hidden), norm over hidden.
    B, S, D = 2, 8, 32
    parameter_shape = (D,)

    key = jax.random.PRNGKey(0)
    x = jax.random.normal(key, (B, S, D), dtype=jnp.float32)

    # Deterministic parameter init, exactly as in the module's __init__.
    gamma = jnp.ones(parameter_shape, dtype=jnp.float32)
    beta = jnp.zeros(parameter_shape, dtype=jnp.float32)

    out = layer_normalization(x, gamma, beta, eps=1e-5)
    jax.block_until_ready(out)

    # Cross-check against a pure-JAX reference of the PyTorch forward.
    mean = jnp.mean(x, axis=-1, keepdims=True)
    var = jnp.mean((x - mean) ** 2, axis=-1, keepdims=True)
    ref = gamma * ((x - mean) / jnp.sqrt(var + 1e-5)) + beta
    assert jnp.allclose(out, ref, atol=1e-5, rtol=1e-4)

    print("KERNEL_OK")
</pallas_src>

<mosaic_0001>
module attributes {stable_mosaic.version = 11 : i64} {
  func.func @_layernorm_kernel(%arg0: i32, %arg1: memref<16x32xf32, #tpu.memory_space<vmem>>, %arg2: memref<1x32xf32, #tpu.memory_space<vmem>>, %arg3: memref<1x32xf32, #tpu.memory_space<vmem>>, %arg4: memref<16x32xf32, #tpu.memory_space<vmem>>) attributes {dimension_semantics = [#tpu.dimension_semantics<parallel>], iteration_bounds = array<i64: 1>, scalar_prefetch = 0 : i64, scratch_operands = 0 : i64, tpu.core_type = #tpu.core_type<tc>, window_params = [{transform_indices = @transform_0, window_bounds = array<i64: 16, 32>}, {pipeline_mode = #tpu.pipeline_mode<synchronous>, transform_indices = @transform_1, window_bounds = array<i64: 1, 32>}, {pipeline_mode = #tpu.pipeline_mode<synchronous>, transform_indices = @transform_2, window_bounds = array<i64: 1, 32>}, {transform_indices = @transform_3, window_bounds = array<i64: 16, 32>}]} {
    %c0 = arith.constant 0 : index
    %c0_0 = arith.constant 0 : index
    %0 = vector.load %arg1[%c0, %c0_0] : memref<16x32xf32, #tpu.memory_space<vmem>>, vector<16x32xf32>
    %cst = arith.constant dense<0.000000e+00> : vector<16xf32>
    %1 = vector.multi_reduction <add>, %0, %cst [1] : vector<16x32xf32> to vector<16xf32>
    %2 = vector.shape_cast %1 : vector<16xf32> to vector<16x1xf32>
    %cst_1 = arith.constant 3.125000e-02 : f32
    %3 = vector.broadcast %cst_1 : f32 to vector<16x1xf32>
    %4 = arith.mulf %2, %3 : vector<16x1xf32>
    %c0_2 = arith.constant 0 : index
    %c0_3 = arith.constant 0 : index
    %5 = vector.load %arg1[%c0_2, %c0_3] : memref<16x32xf32, #tpu.memory_space<vmem>>, vector<16x32xf32>
    %6 = vector.broadcast %4 : vector<16x1xf32> to vector<16x32xf32>
    %7 = arith.subf %5, %6 : vector<16x32xf32>
    %8 = arith.mulf %7, %7 : vector<16x32xf32>
    %cst_4 = arith.constant dense<0.000000e+00> : vector<16xf32>
    %9 = vector.multi_reduction <add>, %8, %cst_4 [1] : vector<16x32xf32> to vector<16xf32>
    %10 = vector.shape_cast %9 : vector<16xf32> to vector<16x1xf32>
    %cst_5 = arith.constant 3.125000e-02 : f32
    %11 = vector.broadcast %cst_5 : f32 to vector<16x1xf32>
    %12 = arith.mulf %10, %11 : vector<16x1xf32>
    %cst_6 = arith.constant 9.99999974E-6 : f32
    %13 = vector.broadcast %cst_6 : f32 to vector<16x1xf32>
    %14 = arith.addf %12, %13 : vector<16x1xf32>
    %15 = math.rsqrt %14 : vector<16x1xf32>
    %c0_7 = arith.constant 0 : index
    %c0_8 = arith.constant 0 : index
    %16 = vector.load %arg2[%c0_7, %c0_8] : memref<1x32xf32, #tpu.memory_space<vmem>>, vector<1x32xf32>
    %17 = vector.broadcast %15 : vector<16x1xf32> to vector<16x32xf32>
    %18 = arith.mulf %7, %17 : vector<16x32xf32>
    %19 = vector.broadcast %16 : vector<1x32xf32> to vector<16x32xf32>
    %20 = arith.mulf %19, %18 : vector<16x32xf32>
    %c0_9 = arith.constant 0 : index
    %c0_10 = arith.constant 0 : index
    %21 = vector.load %arg3[%c0_9, %c0_10] : memref<1x32xf32, #tpu.memory_space<vmem>>, vector<1x32xf32>
    %22 = vector.broadcast %21 : vector<1x32xf32> to vector<16x32xf32>
    %23 = arith.addf %20, %22 : vector<16x32xf32>
    %c0_11 = arith.constant 0 : index
    %c0_12 = arith.constant 0 : index
    %24 = vector.load %arg4[%c0_11, %c0_12] : memref<16x32xf32, #tpu.memory_space<vmem>>, vector<16x32xf32>
    tpu.vector_store %arg4[%c0_11, %c0_12], %23 {strides = array<i32>} : memref<16x32xf32, #tpu.memory_space<vmem>>, vector<16x32xf32>,
    return
  }
  func.func @transform_0(%arg0: i32) -> (i32, i32) {
    %c0_i32 = arith.constant 0 : i32
    %c0_i32_0 = arith.constant 0 : i32
    return %arg0, %c0_i32 : i32, i32
  }
  func.func @transform_1(%arg0: i32) -> (i32, i32) {
    %c0_i32 = arith.constant 0 : i32
    %c0_i32_0 = arith.constant 0 : i32
    %c0_i32_1 = arith.constant 0 : i32
    return %c0_i32, %c0_i32_0 : i32, i32
  }
  func.func @transform_2(%arg0: i32) -> (i32, i32) {
    %c0_i32 = arith.constant 0 : i32
    %c0_i32_0 = arith.constant 0 : i32
    %c0_i32_1 = arith.constant 0 : i32
    return %c0_i32, %c0_i32_0 : i32, i32
  }
  func.func @transform_3(%arg0: i32) -> (i32, i32) {
    %c0_i32 = arith.constant 0 : i32
    %c0_i32_0 = arith.constant 0 : i32
    return %arg0, %c0_i32 : i32, i32
  }
}

</mosaic_0001>

<llo_original>
// kernel: tpu_custom_call.1
$region0: #{tpu_custom_call.1}
  #allocation0 [shape = 'u32[]', space=smem, size = 0x4, offset = 0x4, fixed_abs, tag = 'smem constant byte address 0x4 - core index']
  #allocation1 [shape = 'u32[144,128]{1,0:T(1,128)}', space=vmem, size = 0x12000, scoped, tag = 'internal scratch']
  %s0 = inlined_call_operand.hbm [shape: f32[16,32], index: 0, kind: input, shape index: {}]
  %s1 = inlined_call_operand.hbm [shape: f32[1,32], index: 1, kind: input, shape index: {}]
  %s2 = inlined_call_operand.hbm [shape: f32[1,32], index: 2, kind: input, shape index: {}]
  %s3 = inlined_call_operand.hbm [shape: f32[16,32], index: 3, kind: output, shape index: {}]
  %s4 = sld [smem:[#allocation0]]
  $region34: #{tpu_custom_call.1} parent=0
    _
  %s6 = ssub.s32 1, %s4
  %s7 = scalar_select 0, %s6, %s4
  $region1: #{tpu_custom_call.1} parent=0
    #allocation2 [shape = 'u8[8192]{0}', space=vmem, size = 0x2000, scoped, tag = 'input window, operand 0, single buffered']
    #allocation3 [shape = 's32[1]{0}', space=sflag, size = 0x4, scoped, tag = 'scoped memory for tpu_custom_call.1']
    #allocation4 [shape = 's32[1]{0}', space=sflag, size = 0x4, scoped, tag = 'scoped memory for tpu_custom_call.1']
    #allocation5 [shape = 'u8[512]{0}', space=vmem, size = 0x400, scoped, tag = 'input window, operand 1, single buffered']
    #allocation6 [shape = 's32[1]{0}', space=sflag, size = 0x4, scoped, tag = 'scoped memory for tpu_custom_call.1']
    #allocation7 [shape = 'u8[512]{0}', space=vmem, size = 0x400, scoped, tag = 'input window, operand 2, single buffered']
    #allocation8 [shape = 'u8[8192]{0}', space=vmem, size = 0x2000, scoped, tag = 'output window, operand 0, single buffered']
    %8 = vsyncpa [#allocation3], 0
    %9 = vsyncpa [#allocation6], 0
    %10 = vsyncpa [#allocation4], 0
    // Predicated region
    $region2: #{tpu_custom_call.1} parent=1 // pred_check
      _
    $region3: #{tpu_custom_call.1} parent=1 // pred_check_branch
      %12 = sbr.rel (0) target = $region5
    $region4: #{tpu_custom_call.1} parent=1 // pred_region
      %s14 = ssub.s32 256, 256
      %15 = vsyncadd [#allocation3], %s14
      %s16 = sshll.u32 [#allocation2], 4
      %s17 = int_to_ptr.vmem [resolvable:$true] %s16
      %22 = dma.hbm_to_vmem [thread:$0]  %s0, 256, %s17, [#allocation3], 128, 128, 8
    $region5: #{tpu_custom_call.1} parent=1 // pred_fallthru
      _
    // Predicated region
    $region6: #{tpu_custom_call.1} parent=1 // pred_check
      _
    $region7: #{tpu_custom_call.1} parent=1 // pred_check_branch
      %24 = sbr.rel (0) target = $region9
    $region8: #{tpu_custom_call.1} parent=1 // pred_region
      %s26 = ssub.s32 16, 16
      %27 = vsyncadd [#allocation6], %s26
      %s29 = sshll.u32 [#allocation5], 4
      %s30 = int_to_ptr.vmem [resolvable:$true] %s29
      %32 = dma.hbm_to_vmem [thread:$0]  %s1, 16, %s30, [#allocation6]
    $region9: #{tpu_custom_call.1} parent=1 // pred_fallthru
      _
    // Predicated region
    $region10: #{tpu_custom_call.1} parent=1 // pred_check
      _
    $region11: #{tpu_custom_call.1} parent=1 // pred_check_branch
      %34 = sbr.rel (0) target = $region13
    $region12: #{tpu_custom_call.1} parent=1 // pred_region
      %s36 = ssub.s32 16, 16
      %37 = vsyncadd [#allocation6], %s36
      %s39 = sshll.u32 [#allocation7], 4
      %s40 = int_to_ptr.vmem [resolvable:$true] %s39
      %42 = dma.hbm_to_vmem [thread:$0]  %s2, 16, %s40, [#allocation6]
    $region13: #{tpu_custom_call.1} parent=1 // pred_fallthru
      _
    // Predicated region
    $region14: #{tpu_custom_call.1} parent=1 // pred_check
      _
    $region15: #{tpu_custom_call.1} parent=1 // pred_check_branch
      %44 = sbr.rel (0) target = $region17
    $region16: #{tpu_custom_call.1} parent=1 // pred_region
      %45 = dma.done [#allocation3], 256
    $region17: #{tpu_custom_call.1} parent=1 // pred_fallthru
      _
    // Predicated region
    $region18: #{tpu_custom_call.1} parent=1 // pred_check
      _
    $region19: #{tpu_custom_call.1} parent=1 // pred_check_branch
      %47 = sbr.rel (0) target = $region21
    $region20: #{tpu_custom_call.1} parent=1 // pred_region
      %48 = dma.done [#allocation6], 16
    $region21: #{tpu_custom_call.1} parent=1 // pred_fallthru
      _
    // Predicated region
    $region22: #{tpu_custom_call.1} parent=1 // pred_check
      _
    $region23: #{tpu_custom_call.1} parent=1 // pred_check_branch
      %50 = sbr.rel (0) target = $region25
    $region24: #{tpu_custom_call.1} parent=1 // pred_region
      %51 = dma.done [#allocation6], 16
    $region25: #{tpu_custom_call.1} parent=1 // pred_fallthru
      _
    %v52 = vld [vmem:[#allocation2] sm:$0xff]
    %v53 = vld [vmem:[#allocation2 + $0x8] sm:$0xff]
    %vm54 = vcmask 261120
    %v55 = vsel %vm54, %v52, 0.0
    %56 = vadd.xlane.f32.xlu0 %v55
    %v57 = vpop.xlane.xlu0 %56
    %v58 = vsel %vm54, %v53, 0.0
    %59 = vadd.xlane.f32.xlu0 %v58
    %v60 = vpop.xlane.xlu0 %59
    %v61 = vmul.f32 %v57, 0.03125
    %v62 = vmul.f32 %v60, 0.03125
    %v63 = vsub.f32 %v52, %v61
    %v64 = vsub.f32 %v53, %v62
    %v65 = vmul.f32 %v63, %v63
    %v66 = vmul.f32 %v64, %v64
    %v67 = vsel %vm54, %v65, 0.0
    %68 = vadd.xlane.f32.xlu0 %v67
    %v69 = vpop.xlane.xlu0 %68
    %v70 = vsel %vm54, %v66, 0.0
    %71 = vadd.xlane.f32.xlu0 %v70
    %v72 = vpop.xlane.xlu0 %71
    %v73 = vmul.f32 %v69, 0.03125
    %v74 = vmul.f32 %v72, 0.03125
    %v75 = vadd.f32 %v73, 1e-05
    %v76 = vadd.f32 %v74, 1e-05
    %v77 = vrsqrt.pop %v75
    %v78 = vrsqrt.pop %v76
    %v79 = vld [vmem:[#allocation5] sm:$0x1]
    %v80 = vmul.f32 %v63, %v77
    %v81 = vmul.f32 %v64, %v78
    %v83 = vlaneseq
    %v84 = vshrl.u32 %v83, 7
    %v85 = vsub.s32 0, %v84
    %v86 = vrot.slane %v79, %v85
    %v88 = vmul.f32 %v86, %v80
    %v89 = vmul.f32 %v86, %v81
    %v90 = vld [vmem:[#allocation7] sm:$0x1]
    %v92 = vlaneseq
    %v93 = vshrl.u32 %v92, 7
    %v94 = vsub.s32 0, %v93
    %v95 = vrot.slane %v90, %v94
    %v97 = vadd.f32 %v88, %v95
    %v98 = vadd.f32 %v89, %v95
    %99 = vst.msk [vmem:[#allocation8] sm:$0xff] %vm54, %v97
    %100 = vst.msk [vmem:[#allocation8 + $0x8] sm:$0xff] %vm54, %v98
    // Predicated region
    $region26: #{tpu_custom_call.1} parent=1 // pred_check
      _
    $region27: #{tpu_custom_call.1} parent=1 // pred_check_branch
      %102 = sbr.rel (0) target = $region29
    $region28: #{tpu_custom_call.1} parent=1 // pred_region
      %s104 = ssub.s32 256, 256
      %105 = vsyncadd [#allocation4], %s104
      %s106 = sshll.u32 [#allocation8], 4
      %s107 = int_to_ptr.vmem [resolvable:$true] %s106
      %112 = dma.vmem_to_hbm [thread:$0]  %s107, 256, %s3, [#allocation4], 128, 128, 8
    $region29: #{tpu_custom_call.1} parent=1 // pred_fallthru
      _
    // Predicated region
    $region30: #{tpu_custom_call.1} parent=1 // pred_check
      _
    $region31: #{tpu_custom_call.1} parent=1 // pred_check_branch
      %114 = sbr.rel (0) target = $region33
    $region32: #{tpu_custom_call.1} parent=1 // pred_region
      %115 = dma.done [#allocation4], 256
    $region33: #{tpu_custom_call.1} parent=1 // pred_fallthru
      _
    %116 = vsyncpa [#allocation3], 1
    %117 = vsyncpa [#allocation6], 1
    %118 = vsyncpa [#allocation4], 1

</llo_original>
